<compile_context>
chip_gen: v7x
topology: tpu7x:2x2x1
jax: 0.10.0
libtpu: 0.0.40
codegen_flags: <defaults>
</compile_context>

<pallas_src>
import functools

import jax
import jax.numpy as jnp
from jax import lax
from jax.experimental import pallas as pl
from jax.experimental.pallas import tpu as pltpu


LANE = 128            # every matmul N dim is exactly the lane width
PACK = 16             # conv1 packs 16 pixels per GEMM row (16 * c1 == 128)
CONV1_TM_CAP = 2048   # packed rows (16 pixels each) per grid step
DET_TM_CAP = 1024     # detect pixels per grid step
VMEM_LIMIT = 32 * 1024 * 1024   # explicit budget; safe on v5e/v6e/v7x


def _pick_tile(rows, cap):
    """Largest multiple-of-16 divisor of `rows` <= cap, leaving >=2 grid steps
    when rows allows it; falls back to the full extent."""
    if rows <= 16:
        return rows
    limit = min(cap, rows // 2)
    best = 0
    t = 16
    while t <= limit:
        if rows % t == 0:
            best = t
        t += 16
    return best if best else rows


# ----------------------------- Pallas kernels ------------------------------

def _packed_mm_silu_kernel(x_ref, w_ref, b_ref, o_ref):
    """Conv1-as-block-diagonal-matmul (bf16, f32 accumulate) + bias + SiLU.

    16 pixels are packed per row via a block-diagonal weight, so all 128
    output lanes are real data and the bf16 store is lane-dense."""
    acc = jnp.dot(x_ref[...], w_ref[...], preferred_element_type=jnp.float32)
    acc = acc + b_ref[...]
    sig = pl.reciprocal(1.0 + jnp.exp(-acc), approx=True)   # EUP reciprocal
    o_ref[...] = (acc * sig).astype(o_ref.dtype)             # bf16


def _conv_silu_detect_kernel(x_ref, w2_ref, b2_ref, w3_ref, b3_ref, dtab_ref,
                             o_ref, *, no, na, nx, tm):
    """Fused conv2 (matmul + SiLU) -> 1x1 Detect head -> YOLOv5 decode.

    Writes the anchor-major (na, tm, no) output block directly so no XLA
    transpose / slice is needed downstream."""
    a2 = jnp.dot(x_ref[...], w2_ref[...], preferred_element_type=jnp.float32)
    a2 = a2 + b2_ref[...]
    y = a2 * pl.reciprocal(1.0 + jnp.exp(-a2), approx=True)       # SiLU

    p = jnp.dot(y.astype(w3_ref.dtype), w3_ref[...],
                preferred_element_type=jnp.float32)
    p = p + b3_ref[...]
    s = 1.0 / (1.0 + jnp.exp(-p))     # exact sigmoid for detection scores

    # Precomputed per-column decode tables (scale row + one-hot masks).
    mul = dtab_ref[0:1, :]
    mx = dtab_ref[1:2, :]
    my = dtab_ref[2:3, :]
    mwh = dtab_ref[3:4, :]

    # Grid-cell offsets for this row tile (pixel index within one image).
    rows = pl.program_id(1) * tm + lax.broadcasted_iota(jnp.int32, (tm, 1), 0)
    gy = (rows // nx).astype(jnp.float32)
    gx = (rows % nx).astype(jnp.float32)
    gadd = gx * mx + gy * my                                        # (tm, 128)

    s2 = s * 2.0
    xy = (s2 - 0.5 + gadd) * mul      # box centers (xy columns)
    wh = (s2 * s2) * mul              # box sizes   (wh columns)
    mxy = mx + my
    out = mxy * xy + mwh * wh + (1.0 - mxy - mwh) * s

    for anc in range(na):             # static 3-iteration loop
        o_ref[anc, :, :] = out[:, anc * no:(anc + 1) * no]


# ------------------------------ kernel wrappers -----------------------------

def conv1_silu(xp, w, bias, *, tm):
    rows, k = xp.shape
    n = w.shape[1]
    return pl.pallas_call(
        _packed_mm_silu_kernel,
        out_shape=jax.ShapeDtypeStruct((rows, n), jnp.bfloat16),
        grid=(rows // tm,),
        in_specs=[
            pl.BlockSpec((tm, k), lambda i: (i, 0)),
            pl.BlockSpec((k, n), lambda i: (0, 0)),
            pl.BlockSpec((1, n), lambda i: (0, 0)),
        ],
        out_specs=pl.BlockSpec((tm, n), lambda i: (i, 0)),
        compiler_params=pltpu.CompilerParams(
            dimension_semantics=("parallel",),
            vmem_limit_bytes=VMEM_LIMIT),
    )(xp, w, bias)


def conv_silu_detect(x2, w2, b2, w3, b3, dtab, *, no, na, nx, tm):
    b, rows, k2 = x2.shape
    kernel = functools.partial(_conv_silu_detect_kernel,
                               no=no, na=na, nx=nx, tm=tm)
    return pl.pallas_call(
        kernel,
        out_shape=jax.ShapeDtypeStruct((b, na, rows, no), jnp.float32),
        grid=(b, rows // tm),
        in_specs=[
            pl.BlockSpec((None, tm, k2), lambda bi, i: (bi, i, 0)),
            pl.BlockSpec((k2, LANE), lambda bi, i: (0, 0)),
            pl.BlockSpec((1, LANE), lambda bi, i: (0, 0)),
            pl.BlockSpec((LANE, LANE), lambda bi, i: (0, 0)),
            pl.BlockSpec((1, LANE), lambda bi, i: (0, 0)),
            pl.BlockSpec((4, LANE), lambda bi, i: (0, 0)),
        ],
        out_specs=pl.BlockSpec((None, na, tm, no), lambda bi, i: (bi, 0, i, 0)),
        compiler_params=pltpu.CompilerParams(
            dimension_semantics=("parallel", "parallel"),
            vmem_limit_bytes=VMEM_LIMIT),
    )(x2, w2, b2, w3, b3, dtab)


# --------------------------------- glue ------------------------------------

def _im2col_nhwc(x_nhwc, k, stride, pad):
    """NHWC conv-patch extraction in the input dtype (bf16 here); the MAC work
    happens inside the Pallas kernels."""
    patches = lax.conv_general_dilated_patches(
        x_nhwc, filter_shape=(k, k), window_strides=(stride, stride),
        padding=((pad, pad), (pad, pad)),
        dimension_numbers=("NHWC", "HWIO", "NHWC"))
    _, ho, wo, _ = patches.shape
    return patches.astype(x_nhwc.dtype), ho, wo


class DetectMultiBackendPallas:
    """Pallas re-implementation of DetectMultiBackend.forward (pt=True path)."""

    def __init__(self, key, ch_in=3, c1=8, c2=16, nc=4, na=3):
        self.pt = True
        # API parity: the torch module sets stride = max(model.stride, 32); the
        # decode below uses the actual downsampling factor of this toy model.
        self.stride = 32
        self.names = [f"class{i}" for i in range(nc)]
        self.nc, self.na, self.no = nc, na, nc + 5
        self.c1, self.c2 = c1, c2
        self.n_det = na * self.no
        self.K1 = ch_in * 9
        self.K2 = c1 * 9
        assert PACK * c1 == LANE, "conv1 packing must fill the 128 lanes"

        k1, k2, k3, k4, k5, k6 = jax.random.split(key, 6)
        self.w1 = (jax.random.normal(k1, (self.K1, c1), jnp.float32) * 0.1
                   ).astype(jnp.bfloat16)
        self.w2 = (jax.random.normal(k2, (self.K2, c2), jnp.float32) * 0.1
                   ).astype(jnp.bfloat16)
        self.w3 = (jax.random.normal(k3, (c2, self.n_det), jnp.float32) * 0.1
                   ).astype(jnp.bfloat16)
        self.b1 = jax.random.normal(k4, (c1,), jnp.float32) * 0.1
        self.b2 = jax.random.normal(k5, (c2,), jnp.float32) * 0.1
        self.b3 = jax.random.normal(k6, (self.n_det,), jnp.float32) * 0.1
        self.anchors = jnp.array([[10.0, 13.0], [16.0, 30.0], [33.0, 23.0]],
                                 jnp.float32)

        # conv1: block-diagonal weight so 16 pixels share one GEMM row and the
        # 128 output lanes are all real data (same MXU MAC count as before —
        # the old N-padding waste is simply re-used as structure).
        w1blk = jnp.zeros((PACK * self.K1, LANE), jnp.bfloat16)
        for j in range(PACK):
            w1blk = w1blk.at[j * self.K1:(j + 1) * self.K1,
                             j * c1:(j + 1) * c1].set(self.w1)
        self.w1_pk = w1blk
        self.b1_pk = jnp.tile(self.b1, PACK).reshape(1, LANE)

        # conv2 + head: lane-padded (N -> 128) bf16 weights, f32 biases.
        self.w2_pk = (jnp.zeros((self.K2, LANE), jnp.bfloat16)
                      .at[:, :c2].set(self.w2))
        self.b2_pk = jnp.zeros((1, LANE), jnp.float32).at[0, :c2].set(self.b2)
        self.w3_pk = (jnp.zeros((LANE, LANE), jnp.bfloat16)
                      .at[:c2, :self.n_det].set(self.w3))
        self.b3_pk = (jnp.zeros((1, LANE), jnp.float32)
                      .at[0, :self.n_det].set(self.b3))

    def _mul_vec(self, stride_det):
        """Per-column decode scale (stride for xy, anchor wh, 1 elsewhere)."""
        rows = []
        for a in range(self.na):
            rows.append(jnp.concatenate([
                jnp.full((2,), float(stride_det), jnp.float32),
                self.anchors[a],
                jnp.ones((self.no - 4,), jnp.float32)]))
        return jnp.concatenate(rows)                          # (n_det,)

    def _decode_table(self, stride_det):
        """(4, 128) table: row0 = scale, rows1-3 = xy/yx/wh column masks."""
        mul = (jnp.ones((LANE,), jnp.float32)
               .at[:self.n_det].set(self._mul_vec(stride_det)))
        col = jnp.arange(LANE)
        cmod = col % self.no
        real = col < self.n_det
        mx = ((cmod == 0) & real).astype(jnp.float32)
        my = ((cmod == 1) & real).astype(jnp.float32)
        mwh = ((cmod >= 2) & (cmod < 4) & real).astype(jnp.float32)
        return jnp.stack([mul, mx, my, mwh], axis=0)

    def forward(self, im, visualize=False, val=False):
        b, ch, h, w = im.shape                              # NCHW like torch
        assert h % 4 == 0 and w % 4 == 0, "input must be stride-divisible"
        x = jnp.transpose(im, (0, 2, 3, 1)).astype(jnp.bfloat16)  # one transpose

        # conv1 (3x3 s2) + SiLU : bf16 im2col -> packed block-diagonal GEMM.
        p1, h1, w1 = _im2col_nhwc(x, 3, 2, 1)               # (b,h1,w1,K1) bf16
        m1 = b * h1 * w1
        assert m1 % PACK == 0
        x1 = p1.reshape(m1 // PACK, PACK * self.K1)         # free reshape
        tm1 = _pick_tile(m1 // PACK, CONV1_TM_CAP)
        y1 = conv1_silu(x1, self.w1_pk, self.b1_pk, tm=tm1)  # (m1/16,128) bf16
        f1 = y1.reshape(b, h1, w1, self.c1)                  # layout-compatible

        # conv2 (3x3 s2) + SiLU + 1x1 Detect head + decode, one fused kernel.
        p2, h2, w2 = _im2col_nhwc(f1, 3, 2, 1)               # (b,h2,w2,K2) bf16
        R = h2 * w2
        x2 = p2.reshape(b, R, self.K2)
        stride_det = h // h2
        dtab = self._decode_table(stride_det)
        tm2 = _pick_tile(R, DET_TM_CAP)
        det = conv_silu_detect(x2, self.w2_pk, self.b2_pk, self.w3_pk,
                               self.b3_pk, dtab,
                               no=self.no, na=self.na, nx=w2, tm=tm2)
        y = det.reshape(b, self.na * R, self.no)             # anchor-major
        return (y, []) if val else y

    __call__ = forward


def _reference_forward(model, im):
    """Pure-JAX reference (same bf16 quantization points, exact sigmoid)."""
    def sig(v):
        return 1.0 / (1.0 + jnp.exp(-v))

    b, ch, h, w = im.shape
    x = jnp.transpose(im, (0, 2, 3, 1)).astype(jnp.bfloat16)
    p1, h1, w1 = _im2col_nhwc(x, 3, 2, 1)
    a1 = jnp.dot(p1.reshape(-1, model.K1), model.w1,
                 preferred_element_type=jnp.float32) + model.b1
    y1 = (a1 * sig(a1)).astype(jnp.bfloat16)
    f1 = y1.reshape(b, h1, w1, model.c1)

    p2, h2, w2 = _im2col_nhwc(f1, 3, 2, 1)
    a2 = jnp.dot(p2.reshape(-1, model.K2), model.w2,
                 preferred_element_type=jnp.float32) + model.b2
    y2 = a2 * sig(a2)
    p = jnp.dot(y2.astype(jnp.bfloat16), model.w3,
                preferred_element_type=jnp.float32) + model.b3
    s = sig(p)

    stride_det = h // h2
    mul = model._mul_vec(stride_det)[None, :]
    m2 = b * h2 * w2
    r = jnp.arange(m2) % (h2 * w2)
    gy = (r // w2).astype(jnp.float32)[:, None]
    gx = (r % w2).astype(jnp.float32)[:, None]
    col = jnp.arange(model.n_det)[None, :]
    cmod = col % model.no
    gadd = jnp.where(cmod == 0, gx, jnp.where(cmod == 1, gy, 0.0))
    xy = (s * 2.0 - 0.5 + gadd) * mul
    wh = (s * 2.0) ** 2 * mul
    out = jnp.where(cmod < 2, xy, jnp.where(cmod < 4, wh, s))
    return (out.reshape(b, h2, w2, model.na, model.no)
               .transpose(0, 3, 1, 2, 4)
               .reshape(b, model.na * h2 * w2, model.no))


if __name__ == "__main__":
    key = jax.random.PRNGKey(0)
    kp, kx = jax.random.split(key)
    model = DetectMultiBackendPallas(kp)
    # NCHW image batch in [0, 1), like YOLOv5 preprocessed input.
    im = jax.random.uniform(kx, (2, 3, 16, 16), dtype=jnp.float32)

    y = model.forward(im, val=False)
    y = jax.block_until_ready(y)
    assert y.shape == (2, 3 * 4 * 4, 9), y.shape

    ref = _reference_forward(model, im)
    max_err = float(jnp.max(jnp.abs(y - ref)))
    assert jnp.allclose(y, ref, rtol=2e-2, atol=2e-2), max_err

    y_val, extra = model.forward(im, val=True)
    jax.block_until_ready(y_val)
    assert extra == [] and y_val.shape == y.shape

    print("KERNEL_OK")
</pallas_src>

<mosaic_0001>
module attributes {stable_mosaic.version = 11 : i64} {
  func.func @_packed_mm_silu_kernel(%arg0: i32, %arg1: memref<8x432xbf16, #tpu.memory_space<vmem>>, %arg2: memref<432x128xbf16, #tpu.memory_space<vmem>>, %arg3: memref<1x128xf32, #tpu.memory_space<vmem>>, %arg4: memref<8x128xbf16, #tpu.memory_space<vmem>>) attributes {dimension_semantics = [#tpu.dimension_semantics<parallel>], iteration_bounds = array<i64: 1>, scalar_prefetch = 0 : i64, scratch_operands = 0 : i64, tpu.core_type = #tpu.core_type<tc>, window_params = [{transform_indices = @transform_0, window_bounds = array<i64: 8, 432>}, {pipeline_mode = #tpu.pipeline_mode<synchronous>, transform_indices = @transform_1, window_bounds = array<i64: 432, 128>}, {pipeline_mode = #tpu.pipeline_mode<synchronous>, transform_indices = @transform_2, window_bounds = array<i64: 1, 128>}, {transform_indices = @transform_3, window_bounds = array<i64: 8, 128>}]} {
    %c0 = arith.constant 0 : index
    %c0_0 = arith.constant 0 : index
    %0 = vector.load %arg1[%c0, %c0_0] : memref<8x432xbf16, #tpu.memory_space<vmem>>, vector<8x432xbf16>
    %c0_1 = arith.constant 0 : index
    %c0_2 = arith.constant 0 : index
    %1 = vector.load %arg2[%c0_1, %c0_2] : memref<432x128xbf16, #tpu.memory_space<vmem>>, vector<432x128xbf16>
    %cst = arith.constant dense<0.000000e+00> : vector<8x128xf32>
    %2 = tpu.matmul %0, %1, %cst {dimension_numbers = #tpu.dot_dimension_numbers<[1], [0], [0], [1], [0, 0, 1, 1], [], []>} : vector<8x432xbf16>, vector<432x128xbf16>, vector<8x128xf32> -> vector<8x128xf32>
    %c0_3 = arith.constant 0 : index
    %c0_4 = arith.constant 0 : index
    %3 = vector.load %arg3[%c0_3, %c0_4] : memref<1x128xf32, #tpu.memory_space<vmem>>, vector<1x128xf32>
    %4 = vector.broadcast %3 : vector<1x128xf32> to vector<8x128xf32>
    %5 = arith.addf %2, %4 : vector<8x128xf32>
    %cst_5 = arith.constant 0.000000e+00 : f32
    %6 = vector.broadcast %cst_5 : f32 to vector<8x128xf32>
    %7 = arith.subf %6, %5 : vector<8x128xf32>
    %8 = math.exp %7 : vector<8x128xf32>
    %cst_6 = arith.constant 1.000000e+00 : f32
    %9 = vector.broadcast %cst_6 : f32 to vector<8x128xf32>
    %10 = arith.addf %9, %8 : vector<8x128xf32>
    %11 = tpu.reciprocal %10 {approx = true} : vector<8x128xf32> -> vector<8x128xf32>
    %12 = arith.mulf %5, %11 : vector<8x128xf32>
    %13 = arith.truncf %12 : vector<8x128xf32> to vector<8x128xbf16>
    %c0_7 = arith.constant 0 : index
    %c0_8 = arith.constant 0 : index
    %14 = vector.load %arg4[%c0_7, %c0_8] : memref<8x128xbf16, #tpu.memory_space<vmem>>, vector<8x128xbf16>
    tpu.vector_store %arg4[%c0_7, %c0_8], %13 {strides = array<i32>} : memref<8x128xbf16, #tpu.memory_space<vmem>>, vector<8x128xbf16>,
    return
  }
  func.func @transform_0(%arg0: i32) -> (i32, i32) {
    %c0_i32 = arith.constant 0 : i32
    %c0_i32_0 = arith.constant 0 : i32
    return %arg0, %c0_i32 : i32, i32
  }
  func.func @transform_1(%arg0: i32) -> (i32, i32) {
    %c0_i32 = arith.constant 0 : i32
    %c0_i32_0 = arith.constant 0 : i32
    %c0_i32_1 = arith.constant 0 : i32
    return %c0_i32, %c0_i32_0 : i32, i32
  }
  func.func @transform_2(%arg0: i32) -> (i32, i32) {
    %c0_i32 = arith.constant 0 : i32
    %c0_i32_0 = arith.constant 0 : i32
    %c0_i32_1 = arith.constant 0 : i32
    return %c0_i32, %c0_i32_0 : i32, i32
  }
  func.func @transform_3(%arg0: i32) -> (i32, i32) {
    %c0_i32 = arith.constant 0 : i32
    %c0_i32_0 = arith.constant 0 : i32
    return %arg0, %c0_i32 : i32, i32
  }
}

</mosaic_0001>

<llo_original>
// kernel: tpu_custom_call.1
$region0: #{tpu_custom_call.1}
  #allocation0 [shape = 'u32[]', space=smem, size = 0x4, offset = 0x4, fixed_abs, tag = 'smem constant byte address 0x4 - core index']
  #allocation1 [shape = 'u32[144,128]{1,0:T(1,128)}', space=vmem, size = 0x12000, scoped, tag = 'internal scratch']
  %s0 = inlined_call_operand.hbm [shape: bf16[8,432], index: 0, kind: input, shape index: {}]
  %s1 = inlined_call_operand.hbm [shape: bf16[432,128], index: 1, kind: input, shape index: {}]
  %s2 = inlined_call_operand.vmem [shape: f32[1,128], index: 2, kind: input, shape index: {}]
  %s3 = inlined_call_operand.hbm [shape: bf16[8,128], index: 3, kind: output, shape index: {}]
  %s4 = sld [smem:[#allocation0]]
  $region30: #{tpu_custom_call.1} parent=0
    _
  %s6 = ssub.s32 1, %s4
  %s7 = scalar_select 0, %s6, %s4
  $region1: #{tpu_custom_call.1} parent=0
    #allocation2 [shape = 'u8[8192]{0}', space=vmem, size = 0x2000, scoped, tag = 'input window, operand 0, single buffered']
    #allocation3 [shape = 's32[1]{0}', space=sflag, size = 0x4, scoped, tag = 'scoped memory for tpu_custom_call.1']
    #allocation4 [shape = 's32[1]{0}', space=sflag, size = 0x4, scoped, tag = 'scoped memory for tpu_custom_call.1']
    #allocation5 [shape = 'u8[110592]{0}', space=vmem, size = 0x1b000, scoped, tag = 'input window, operand 1, single buffered']
    #allocation6 [shape = 's32[1]{0}', space=sflag, size = 0x4, scoped, tag = 'scoped memory for tpu_custom_call.1']
    #allocation7 [shape = 'u8[2048]{0}', space=vmem, size = 0x800, scoped, tag = 'output window, operand 0, single buffered']
    %8 = vsyncpa [#allocation3], 0
    %9 = vsyncpa [#allocation6], 0
    %10 = vsyncpa [#allocation4], 0
    // Predicated region
    $region2: #{tpu_custom_call.1} parent=1 // pred_check
      _
    $region3: #{tpu_custom_call.1} parent=1 // pred_check_branch
      %12 = sbr.rel (0) target = $region5
    $region4: #{tpu_custom_call.1} parent=1 // pred_region
      %s14 = ssub.s32 256, 256
      %15 = vsyncadd [#allocation3], %s14
      %s17 = sshll.u32 [#allocation2], 4
      %s18 = int_to_ptr.vmem [resolvable:$true] %s17
      %20 = dma.hbm_to_vmem [thread:$0]  %s0, 256, %s18, [#allocation3]
    $region5: #{tpu_custom_call.1} parent=1 // pred_fallthru
      _
    // Predicated region
    $region6: #{tpu_custom_call.1} parent=1 // pred_check
      _
    $region7: #{tpu_custom_call.1} parent=1 // pred_check_branch
      %22 = sbr.rel (0) target = $region9
    $region8: #{tpu_custom_call.1} parent=1 // pred_region
      %s24 = ssub.s32 3456, 3456
      %25 = vsyncadd [#allocation6], %s24
      %s26 = sshll.u32 [#allocation5], 4
      %s27 = int_to_ptr.vmem [resolvable:$true] %s26
      %32 = dma.hbm_to_vmem [thread:$0]  %s1, 3456, %s27, [#allocation6], 64, 64, 4
    $region9: #{tpu_custom_call.1} parent=1 // pred_fallthru
      _
    // Predicated region
    $region10: #{tpu_custom_call.1} parent=1 // pred_check
      _
    $region11: #{tpu_custom_call.1} parent=1 // pred_check_branch
      %34 = sbr.rel (0) target = $region13
    $region12: #{tpu_custom_call.1} parent=1 // pred_region
      _
    $region13: #{tpu_custom_call.1} parent=1 // pred_fallthru
      _
    // Predicated region
    $region14: #{tpu_custom_call.1} parent=1 // pred_check
      _
    $region15: #{tpu_custom_call.1} parent=1 // pred_check_branch
      %36 = sbr.rel (0) target = $region17
    $region16: #{tpu_custom_call.1} parent=1 // pred_region
      %37 = dma.done [#allocation3], 256
    $region17: #{tpu_custom_call.1} parent=1 // pred_fallthru
      _
    // Predicated region
    $region18: #{tpu_custom_call.1} parent=1 // pred_check
      _
    $region19: #{tpu_custom_call.1} parent=1 // pred_check_branch
      %39 = sbr.rel (0) target = $region21
    $region20: #{tpu_custom_call.1} parent=1 // pred_region
      %40 = dma.done [#allocation6], 3456
    $region21: #{tpu_custom_call.1} parent=1 // pred_fallthru
      _
    %v42 = vld [vmem:[#allocation2] sm:$0xff]
    %v43 = vld [vmem:[#allocation2 + $0x8] sm:$0xff]
    %v44 = vld [vmem:[#allocation5] sm:$0xf]
    %v45 = vld [vmem:[#allocation5 + $0x4] sm:$0xf]
    %v46 = vld [vmem:[#allocation5 + $0x8] sm:$0xf]
    %v47 = vld [vmem:[#allocation5 + $0xc] sm:$0xf]
    %v48 = vld [vmem:[#allocation5 + $0x10] sm:$0xf]
    %v49 = vld [vmem:[#allocation5 + $0x14] sm:$0xf]
    %v50 = vld [vmem:[#allocation5 + $0x18] sm:$0xf]
    %v51 = vld [vmem:[#allocation5 + $0x1c] sm:$0xf]
    %v52 = vld [vmem:[#allocation5 + $0x20] sm:$0xf]
    %v53 = vld [vmem:[#allocation5 + $0x24] sm:$0xf]
    %v54 = vld [vmem:[#allocation5 + $0x28] sm:$0xf]
    %v55 = vld [vmem:[#allocation5 + $0x2c] sm:$0xf]
    %v56 = vld [vmem:[#allocation5 + $0x30] sm:$0xf]
    %v57 = vld [vmem:[#allocation5 + $0x34] sm:$0xf]
    %v58 = vld [vmem:[#allocation5 + $0x38] sm:$0xf]
    %v59 = vld [vmem:[#allocation5 + $0x3c] sm:$0xf]
    %v60 = vld [vmem:[#allocation5 + $0x40] sm:$0xf]
    %v61 = vld [vmem:[#allocation5 + $0x44] sm:$0xf]
    %v62 = vld [vmem:[#allocation5 + $0x48] sm:$0xf]
    %v63 = vld [vmem:[#allocation5 + $0x4c] sm:$0xf]
    %v64 = vld [vmem:[#allocation5 + $0x50] sm:$0xf]
    %v65 = vld [vmem:[#allocation5 + $0x54] sm:$0xf]
    %v66 = vld [vmem:[#allocation5 + $0x58] sm:$0xf]
    %v67 = vld [vmem:[#allocation5 + $0x5c] sm:$0xf]
    %v68 = vld [vmem:[#allocation5 + $0x60] sm:$0xf]
    %v69 = vld [vmem:[#allocation5 + $0x64] sm:$0xf]
    %v70 = vld [vmem:[#allocation5 + $0x68] sm:$0xf]
    %v71 = vld [vmem:[#allocation5 + $0x6c] sm:$0xf]
    %v72 = vld [vmem:[#allocation5 + $0x70] sm:$0xf]
    %v73 = vld [vmem:[#allocation5 + $0x74] sm:$0xf]
    %v74 = vld [vmem:[#allocation5 + $0x78] sm:$0xf]
    %v75 = vld [vmem:[#allocation5 + $0x7c] sm:$0xf]
    %v76 = vld [vmem:[#allocation5 + $0x80] sm:$0xf]
    %v77 = vld [vmem:[#allocation5 + $0x84] sm:$0xf]
    %v78 = vld [vmem:[#allocation5 + $0x88] sm:$0xf]
    %v79 = vld [vmem:[#allocation5 + $0x8c] sm:$0xf]
    %v80 = vld [vmem:[#allocation5 + $0x90] sm:$0xf]
    %v81 = vld [vmem:[#allocation5 + $0x94] sm:$0xf]
    %v82 = vld [vmem:[#allocation5 + $0x98] sm:$0xf]
    %v83 = vld [vmem:[#allocation5 + $0x9c] sm:$0xf]
    %v84 = vld [vmem:[#allocation5 + $0xa0] sm:$0xf]
    %v85 = vld [vmem:[#allocation5 + $0xa4] sm:$0xf]
    %v86 = vld [vmem:[#allocation5 + $0xa8] sm:$0xf]
    %v87 = vld [vmem:[#allocation5 + $0xac] sm:$0xf]
    %v88 = vld [vmem:[#allocation5 + $0xb0] sm:$0xf]
    %v89 = vld [vmem:[#allocation5 + $0xb4] sm:$0xf]
    %v90 = vld [vmem:[#allocation5 + $0xb8] sm:$0xf]
    %v91 = vld [vmem:[#allocation5 + $0xbc] sm:$0xf]
    %v92 = vld [vmem:[#allocation5 + $0xc0] sm:$0xf]
    %v93 = vld [vmem:[#allocation5 + $0xc4] sm:$0xf]
    %v94 = vld [vmem:[#allocation5 + $0xc8] sm:$0xf]
    %v95 = vld [vmem:[#allocation5 + $0xcc] sm:$0xf]
    %v96 = vld [vmem:[#allocation5 + $0xd0] sm:$0xf]
    %v97 = vld [vmem:[#allocation5 + $0xd4] sm:$0xf]
    %v98 = vld [vmem:[%s2] sm:$0x1]
    %v100 = vlaneseq
    %v101 = vshrl.u32 %v100, 7
    %v102 = vsub.s32 0, %v101
    %v103 = vrot.slane %v98, %v102
    %v107 = vunpack.c.l.b16 %v42
    %v108 = vunpack.c.h.b16 %v42
    %v109 = vunpack.c.l.b16 %v43
    %v110 = vunpack.c.h.b16 %v43
    %v111 = vpack.c.b16 %v107, %v107
    %v112 = vpack.c.b16 %v108, %v108
    %v113 = vpack.c.b16 %v109, %v109
    %v114 = vpack.c.b16 %v110, %v110
    %v172 = vunpack.c.l.b16 %v44
    %v173 = vunpack.c.l.b16 %v45
    %v174 = vunpack.c.l.b16 %v46
    %v175 = vunpack.c.l.b16 %v47
    %v176 = vunpack.c.l.b16 %v48
    %v177 = vunpack.c.l.b16 %v49
    %v178 = vunpack.c.l.b16 %v50
    %v179 = vunpack.c.l.b16 %v51
    %v180 = vunpack.c.l.b16 %v52
    %v181 = vunpack.c.l.b16 %v53
    %v182 = vunpack.c.l.b16 %v54
    %v183 = vunpack.c.l.b16 %v55
    %v184 = vunpack.c.l.b16 %v56
    %v185 = vunpack.c.l.b16 %v57
    %v186 = vunpack.c.l.b16 %v58
    %v187 = vunpack.c.l.b16 %v59
    %v188 = vunpack.c.l.b16 %v60
    %v189 = vunpack.c.l.b16 %v61
    %v190 = vunpack.c.l.b16 %v62
    %v191 = vunpack.c.l.b16 %v63
    %v192 = vunpack.c.l.b16 %v64
    %v193 = vunpack.c.l.b16 %v65
    %v194 = vunpack.c.l.b16 %v66
    %v195 = vunpack.c.l.b16 %v67
    %v196 = vunpack.c.l.b16 %v68
    %v197 = vunpack.c.l.b16 %v69
    %v198 = vunpack.c.l.b16 %v70
    %v199 = vunpack.c.l.b16 %v71
    %v200 = vunpack.c.l.b16 %v72
    %v201 = vunpack.c.l.b16 %v73
    %v202 = vunpack.c.l.b16 %v74
    %v203 = vunpack.c.l.b16 %v75
    %v204 = vunpack.c.l.b16 %v76
    %v205 = vunpack.c.l.b16 %v77
    %v206 = vunpack.c.l.b16 %v78
    %v207 = vunpack.c.l.b16 %v79
    %v208 = vunpack.c.l.b16 %v80
    %v209 = vunpack.c.l.b16 %v81
    %v210 = vunpack.c.l.b16 %v82
    %v211 = vunpack.c.l.b16 %v83
    %v212 = vunpack.c.l.b16 %v84
    %v213 = vunpack.c.l.b16 %v85
    %v214 = vunpack.c.l.b16 %v86
    %v215 = vunpack.c.l.b16 %v87
    %v216 = vunpack.c.l.b16 %v88
    %v217 = vunpack.c.l.b16 %v89
    %v218 = vunpack.c.l.b16 %v90
    %v219 = vunpack.c.l.b16 %v91
    %v220 = vunpack.c.l.b16 %v92
    %v221 = vunpack.c.l.b16 %v93
    %v222 = vunpack.c.l.b16 %v94
    %v223 = vunpack.c.l.b16 %v95
    %v224 = vunpack.c.l.b16 %v96
    %v225 = vunpack.c.l.b16 %v97
    %v226 = vpack.c.b16 %v173, %v172
    %v227 = vpack.c.b16 %v175, %v174
    %v228 = vpack.c.b16 %v177, %v176
    %v229 = vpack.c.b16 %v179, %v178
    %v230 = vpack.c.b16 %v181, %v180
    %v231 = vpack.c.b16 %v183, %v182
    %v232 = vpack.c.b16 %v185, %v184
    %v233 = vpack.c.b16 %v187, %v186
    %v234 = vpack.c.b16 %v189, %v188
    %v235 = vpack.c.b16 %v191, %v190
    %v236 = vpack.c.b16 %v193, %v192
    %v237 = vpack.c.b16 %v195, %v194
    %v238 = vpack.c.b16 %v197, %v196
    %v239 = vpack.c.b16 %v199, %v198
    %v240 = vpack.c.b16 %v201, %v200
    %v241 = vpack.c.b16 %v203, %v202
    %v242 = vpack.c.b16 %v205, %v204
    %v243 = vpack.c.b16 %v207, %v206
    %v244 = vpack.c.b16 %v209, %v208
    %v245 = vpack.c.b16 %v211, %v210
    %v246 = vpack.c.b16 %v213, %v212
    %v247 = vpack.c.b16 %v215, %v214
    %v248 = vpack.c.b16 %v217, %v216
    %v249 = vpack.c.b16 %v219, %v218
    %v250 = vpack.c.b16 %v221, %v220
    %v251 = vpack.c.b16 %v223, %v222
    %v252 = vpack.c.b16 %v225, %v224
    %vm280 = vcmask 392192
    %v282 = vsel %vm280, %v114, 0
    %284 = vmatprep.subr.bf16.mxu0 0
    %285 = vmatpush1.bf16.msra.mxu0 %v226
    %286 = vmatprep.subr.bf16.mxu0 0
    %287 = vmatpush1.bf16.msra.mxu0 %v227
    %288 = vmatprep.subr.bf16.mxu0 0
    %289 = vmatpush1.bf16.msra.mxu0 %v228
    %290 = vmatprep.subr.bf16.mxu0 0
    %291 = vmatpush1.bf16.msra.mxu0 %v229
    %292 = vmatprep.subr.bf16.mxu0 0
    %293 = vmatpush1.bf16.msra.mxu0 %v230
    %294 = vmatprep.subr.bf16.mxu0 0
    %295 = vmatpush1.bf16.msra.mxu0 %v231
    %296 = vmatprep.subr.bf16.mxu0 0
    %297 = vmatpush1.bf16.msra.mxu0 %v232
    %298 = vmatprep.subr.bf16.mxu0 0
    %299 = vmatpush1.bf16.msra.mxu0 %v233
    %300 = vmatprep.subr.bf16.mxu0 0
    %301 = vmatpush1.bf16.msra.mxu0 %v234
    %302 = vmatprep.subr.bf16.mxu0 0
    %303 = vmatpush1.bf16.msra.mxu0 %v235
    %304 = vmatprep.subr.bf16.mxu0 0
    %305 = vmatpush1.bf16.msra.mxu0 %v236
    %306 = vmatprep.subr.bf16.mxu0 0
    %307 = vmatpush1.bf16.msra.mxu0 %v237
    %308 = vmatprep.subr.bf16.mxu0 0
    %309 = vmatpush1.bf16.msra.mxu0 %v238
    %310 = vmatprep.subr.bf16.mxu0 0
    %311 = vmatpush1.bf16.msra.mxu0 %v239
    %312 = vmatprep.subr.bf16.mxu0 0
    %313 = vmatpush1.bf16.msra.mxu0 %v240
    %314 = vmatprep.subr.bf16.mxu0 0
    %315 = vmatpush1.bf16.msra.mxu0 %v241
    %316 = vmatprep.mubr.bf16.mxu0 %v112
    %317 = vmatmul.mubr.bf16.gmra.mrb[0].mxu0 %v111
    %v318 = vpop.f32.mrb[0].mxu0
    %v319 = vadd.f32 %v103, %v318
    %v320 = vpop.f32.mrb[0].mxu0
    %v321 = vpop.f32.mrb[0].mxu0
    %v322 = vpop.f32.mrb[0].mxu0
    %323 = vdwg.mxu0
    %324 = vmatprep.subr.bf16.mxu0 0
    %325 = vmatpush1.bf16.msra.mxu0 %v242
    %326 = vmatprep.subr.bf16.mxu0 0
    %327 = vmatpush1.bf16.msra.mxu0 %v243
    %328 = vmatprep.subr.bf16.mxu0 0
    %329 = vmatpush1.bf16.msra.mxu0 %v244
    %330 = vmatprep.subr.bf16.mxu0 0
    %331 = vmatpush1.bf16.msra.mxu0 %v245
    %332 = vmatprep.subr.bf16.mxu0 0
    %333 = vmatpush1.bf16.msra.mxu0 %v246
    %334 = vmatprep.subr.bf16.mxu0 0
    %335 = vmatpush1.bf16.msra.mxu0 %v247
    %336 = vmatprep.subr.bf16.mxu0 0
    %337 = vmatpush1.bf16.msra.mxu0 %v248
    %338 = vmatprep.subr.bf16.mxu0 0
    %339 = vmatpush1.bf16.msra.mxu0 %v249
    %340 = vmatprep.subr.bf16.mxu0 0
    %341 = vmatpush1.bf16.msra.mxu0 %v250
    %342 = vmatprep.subr.bf16.mxu0 0
    %343 = vmatpush1.bf16.msra.mxu0 %v251
    %344 = vmatprep.subr.bf16.mxu0 0
    %345 = vmatpush1.bf16.msra.mxu0 %v252
    %346 = vmatprep.subr.bf16.mxu0 0
    %347 = vmatpush1.bf16.msra.mxu0 0
    %348 = vmatprep.subr.bf16.mxu0 0
    %349 = vmatpush1.bf16.msra.mxu0 0
    %350 = vmatprep.subr.bf16.mxu0 0
    %351 = vmatpush1.bf16.msra.mxu0 0
    %352 = vmatprep.subr.bf16.mxu0 0
    %353 = vmatpush1.bf16.msra.mxu0 0
    %354 = vmatprep.subr.bf16.mxu0 0
    %355 = vmatpush1.bf16.msra.mxu0 0
    %356 = vmatprep.mubr.bf16.mxu0 %v282
    %357 = vmatmul.mubr.bf16.gmra.mrb[0].mxu0 %v113
    %v358 = vpop.f32.mrb[0].mxu0
    %v359 = vadd.f32 %v319, %v358
    %v360 = vpop.f32.mrb[0].mxu0
    %v361 = vpop.f32.mrb[0].mxu0
    %v362 = vpop.f32.mrb[0].mxu0
    %363 = vdwg.mxu0
    %v364 = vsub.f32 0.0, %v359
    %v365 = vmul.f32 %v364, 1.442695
    %v366 = vpow.pop %v365
    %v367 = vadd.f32 %v366, 1.0
    %v368 = vrcp.pop %v367
    %v369 = vmul.f32 %v359, %v368
    %v370 = vpack.c.bf16 %v369, %v369
    %371 = vst [vmem:[#allocation7] sm:$0xf] %v370
    // Predicated region
    $region22: #{tpu_custom_call.1} parent=1 // pred_check
      _
    $region23: #{tpu_custom_call.1} parent=1 // pred_check_branch
      %373 = sbr.rel (0) target = $region25
    $region24: #{tpu_custom_call.1} parent=1 // pred_region
      %s375 = ssub.s32 64, 64
      %376 = vsyncadd [#allocation4], %s375
      %s378 = sshll.u32 [#allocation7], 4
      %s379 = int_to_ptr.vmem [resolvable:$true] %s378
      %381 = dma.vmem_to_hbm [thread:$0]  %s379, 64, %s3, [#allocation4]
    $region25: #{tpu_custom_call.1} parent=1 // pred_fallthru
      _
    // Predicated region
    $region26: #{tpu_custom_call.1} parent=1 // pred_check
      _
    $region27: #{tpu_custom_call.1} parent=1 // pred_check_branch
      %383 = sbr.rel (0) target = $region29
    $region28: #{tpu_custom_call.1} parent=1 // pred_region
      %384 = dma.done [#allocation4], 64
    $region29: #{tpu_custom_call.1} parent=1 // pred_fallthru
      _
    %385 = vsyncpa [#allocation3], 1
    %386 = vsyncpa [#allocation6], 1
    %387 = vsyncpa [#allocation4], 1

</llo_original>
